<compile_context>
chip_gen: v5e
topology: v5e:2x2
jax: 0.10.0
libtpu: 0.0.40
codegen_flags: <defaults>
</compile_context>

<pallas_src>
import jax
import jax.numpy as jnp
from jax.experimental import pallas as pl
from jax.experimental.pallas import tpu as pltpu


def embedding_kernel(x_ref, w_ref, b_ref, o_ref):
    # x_ref: (TM, 512) f32, w_ref: (512, TN) bf16, b_ref: (1, TN) f32,
    # o_ref: (TM, TN) f32
    x = jnp.maximum(x_ref[...], 0.0)                       # ReLU in f32 on the VPU
    acc = jnp.dot(x.astype(w_ref.dtype), w_ref[...],       # bf16 x bf16 -> f32 acc on MXU
                  preferred_element_type=jnp.float32)
    o_ref[...] = (acc + b_ref[...]).astype(o_ref.dtype)


def _pick_tile(total, preferred):
    """Largest tile <= preferred that evenly divides `total` (falls back to total)."""
    if total <= preferred:
        return total
    for t in range(preferred, 0, -1):
        if total % t == 0:
            return t
    return total


def embedding_layer(x, w, b):
    """x: (B, 512, 1, 1) f32, w: (512, E) f32, b: (E,) f32 -> (B, E) f32."""
    B = x.shape[0]
    in_features = x.shape[1]
    E = w.shape[1]

    x2d = x.reshape(B, in_features)          # squeeze(-1).squeeze(-1)
    w_bf16 = w.astype(jnp.bfloat16)          # halve the dominant HBM read
    b2d = b.reshape(1, E).astype(jnp.float32)

    # Tile sizes: E tiled at <=512 lanes (multiple of 128 when E is), B tiled at
    # <=256 MXU rows.  Double-buffered bf16 weight tiles: 2*512*TN*2 B <= 1 MiB,
    # comfortably inside v7x's 64 MiB VMEM.
    TN = _pick_tile(E, 512)
    TM = _pick_tile(B, 256)
    grid = (B // TM, E // TN)

    cost = pl.CostEstimate(
        flops=2 * B * in_features * E,
        transcendentals=0,
        bytes_accessed=(4 * B * in_features          # x (f32)
                        + 2 * in_features * E        # w (bf16)
                        + 4 * E                      # b (f32)
                        + 4 * B * E),                # out (f32)
    )

    out = pl.pallas_call(
        embedding_kernel,
        out_shape=jax.ShapeDtypeStruct((B, E), x.dtype),
        grid=grid,
        in_specs=[
            pl.BlockSpec((TM, in_features), lambda i, j: (i, 0)),
            pl.BlockSpec((in_features, TN), lambda i, j: (0, j)),
            pl.BlockSpec((1, TN), lambda i, j: (0, j)),
        ],
        out_specs=pl.BlockSpec((TM, TN), lambda i, j: (i, j)),
        compiler_params=pltpu.CompilerParams(
            dimension_semantics=("parallel", "parallel")),
        cost_estimate=cost,
    )(x2d, w_bf16, b2d)
    return out


if __name__ == "__main__":
    key = jax.random.PRNGKey(0)
    k_x, k_w, k_b = jax.random.split(key, 3)

    B = 2
    IN_FEATURES = 512
    EMBED_SIZE = 128

    # Input matches what the forward implies: (B, 512, 1, 1)
    x = jax.random.normal(k_x, (B, IN_FEATURES, 1, 1), dtype=jnp.float32)

    # Deterministic parameter init (nn.Linear-like uniform range).
    bound = 1.0 / (IN_FEATURES ** 0.5)
    w = jax.random.uniform(k_w, (IN_FEATURES, EMBED_SIZE),
                           minval=-bound, maxval=bound, dtype=jnp.float32)
    b = jax.random.uniform(k_b, (EMBED_SIZE,),
                           minval=-bound, maxval=bound, dtype=jnp.float32)

    out = embedding_layer(x, w, b)
    jax.block_until_ready(out)

    # Reference 1: same bf16-weight compute path (tight tolerance).
    x_relu = jnp.maximum(x.reshape(B, IN_FEATURES), 0.0)
    ref_bf16 = jnp.dot(x_relu.astype(jnp.bfloat16), w.astype(jnp.bfloat16),
                       preferred_element_type=jnp.float32) + b
    # Reference 2: full-f32 nn.Linear reference (loose tolerance for bf16 weights).
    ref_f32 = x_relu @ w + b

    assert out.shape == (B, EMBED_SIZE)
    assert jnp.allclose(out, ref_bf16, atol=1e-4, rtol=1e-4)
    assert jnp.allclose(out, ref_f32, atol=5e-2, rtol=5e-2)

    print("KERNEL_OK")
</pallas_src>

<mosaic_0001>
module attributes {stable_mosaic.version = 11 : i64} {
  func.func @embedding_kernel(%arg0: i32, %arg1: i32, %arg2: memref<2x512xf32, #tpu.memory_space<vmem>>, %arg3: memref<512x128xbf16, #tpu.memory_space<vmem>>, %arg4: memref<1x128xf32, #tpu.memory_space<vmem>>, %arg5: memref<2x128xf32, #tpu.memory_space<vmem>>) attributes {dimension_semantics = [#tpu.dimension_semantics<parallel>, #tpu.dimension_semantics<parallel>], iteration_bounds = array<i64: 1, 1>, scalar_prefetch = 0 : i64, scratch_operands = 0 : i64, tpu.core_type = #tpu.core_type<tc>, window_params = [{transform_indices = @transform_0, window_bounds = array<i64: 2, 512>}, {transform_indices = @transform_1, window_bounds = array<i64: 512, 128>}, {transform_indices = @transform_2, window_bounds = array<i64: 1, 128>}, {transform_indices = @transform_3, window_bounds = array<i64: 2, 128>}]} {
    %c0 = arith.constant 0 : index
    %c0_0 = arith.constant 0 : index
    %0 = vector.load %arg2[%c0, %c0_0] : memref<2x512xf32, #tpu.memory_space<vmem>>, vector<2x512xf32>
    %cst = arith.constant 0.000000e+00 : f32
    %1 = vector.broadcast %cst : f32 to vector<2x512xf32>
    %2 = arith.maximumf %0, %1 : vector<2x512xf32>
    %3 = arith.truncf %2 : vector<2x512xf32> to vector<2x512xbf16>
    %c0_1 = arith.constant 0 : index
    %c0_2 = arith.constant 0 : index
    %4 = vector.load %arg3[%c0_1, %c0_2] : memref<512x128xbf16, #tpu.memory_space<vmem>>, vector<512x128xbf16>
    %cst_3 = arith.constant dense<0.000000e+00> : vector<2x128xf32>
    %5 = tpu.matmul %3, %4, %cst_3 {dimension_numbers = #tpu.dot_dimension_numbers<[1], [0], [0], [1], [0, 0, 1, 1], [], []>} : vector<2x512xbf16>, vector<512x128xbf16>, vector<2x128xf32> -> vector<2x128xf32>
    %c0_4 = arith.constant 0 : index
    %c0_5 = arith.constant 0 : index
    %6 = vector.load %arg4[%c0_4, %c0_5] : memref<1x128xf32, #tpu.memory_space<vmem>>, vector<1x128xf32>
    %7 = vector.broadcast %6 : vector<1x128xf32> to vector<2x128xf32>
    %8 = arith.addf %5, %7 : vector<2x128xf32>
    %c0_6 = arith.constant 0 : index
    %c0_7 = arith.constant 0 : index
    %9 = vector.load %arg5[%c0_6, %c0_7] : memref<2x128xf32, #tpu.memory_space<vmem>>, vector<2x128xf32>
    tpu.vector_store %arg5[%c0_6, %c0_7], %8 {strides = array<i32>} : memref<2x128xf32, #tpu.memory_space<vmem>>, vector<2x128xf32>,
    return
  }
  func.func @transform_0(%arg0: i32, %arg1: i32) -> (i32, i32) {
    %c0_i32 = arith.constant 0 : i32
    %c0_i32_0 = arith.constant 0 : i32
    return %arg0, %c0_i32 : i32, i32
  }
  func.func @transform_1(%arg0: i32, %arg1: i32) -> (i32, i32) {
    %c0_i32 = arith.constant 0 : i32
    %c0_i32_0 = arith.constant 0 : i32
    return %c0_i32, %arg1 : i32, i32
  }
  func.func @transform_2(%arg0: i32, %arg1: i32) -> (i32, i32) {
    %c0_i32 = arith.constant 0 : i32
    %c0_i32_0 = arith.constant 0 : i32
    return %c0_i32, %arg1 : i32, i32
  }
  func.func @transform_3(%arg0: i32, %arg1: i32) -> (i32, i32) {
    %c0_i32 = arith.constant 0 : i32
    return %arg0, %arg1 : i32, i32
  }
}

</mosaic_0001>

<llo_original>
// kernel: tpu_custom_call.1
$region0: #{tpu_custom_call.1}
  #allocation0 [shape = 'u32[]', space=smem, size = 0x4, offset = 0x4, fixed_abs, tag = 'smem constant byte address 0x4 - core index']
  #allocation1 [shape = 'u32[72,128]{1,0:T(1,128)}', space=vmem, size = 0x9000, scoped, tag = 'internal scratch']
  %s0 = inlined_call_operand.hbm [shape: f32[2,512], index: 0, kind: input, shape index: {}]
  %s1 = inlined_call_operand.hbm [shape: bf16[512,128], index: 1, kind: input, shape index: {}]
  %s2 = inlined_call_operand.vmem [shape: f32[1,128], index: 2, kind: input, shape index: {}]
  %s3 = inlined_call_operand.hbm [shape: f32[2,128], index: 3, kind: output, shape index: {}]
  %s4 = sld [smem:[#allocation0]]
  $region30: #{tpu_custom_call.1} parent=0
    _
  %s6 = ssub.s32 1, %s4
  %s7 = scalar_select 0, %s6, %s4
  $region1: #{tpu_custom_call.1} parent=0
    #allocation2 [shape = 'u8[4096]{0}', space=vmem, size = 0x1000, scoped, tag = 'input window, operand 0, single buffered']
    #allocation3 [shape = 's32[1]{0}', space=sflag, size = 0x4, scoped, tag = 'scoped memory for tpu_custom_call.1']
    #allocation4 [shape = 's32[1]{0}', space=sflag, size = 0x4, scoped, tag = 'scoped memory for tpu_custom_call.1']
    #allocation5 [shape = 'u8[131072]{0}', space=vmem, size = 0x20000, scoped, tag = 'input window, operand 1, single buffered']
    #allocation6 [shape = 's32[1]{0}', space=sflag, size = 0x4, scoped, tag = 'scoped memory for tpu_custom_call.1']
    #allocation7 [shape = 'u8[1024]{0}', space=vmem, size = 0x400, scoped, tag = 'output window, operand 0, single buffered']
    %8 = vsyncpa [#allocation3], 0
    %9 = vsyncpa [#allocation6], 0
    %10 = vsyncpa [#allocation4], 0
    // Predicated region
    $region2: #{tpu_custom_call.1} parent=1 // pred_check
      _
    $region3: #{tpu_custom_call.1} parent=1 // pred_check_branch
      %12 = sbr.rel (0) target = $region5
    $region4: #{tpu_custom_call.1} parent=1 // pred_region
      %14 = vsyncadd [#allocation3], 0
      %s16 = sshll.u32 %s0, 4
      %s17 = int_to_ptr.hbm [resolvable:$true] %s16
      %s18 = sshll.u32 [#allocation2], 4
      %s19 = int_to_ptr.vmem [resolvable:$true] %s18
      %21 = dma.hbm_to_vmem [thread:$0]  %s17, 128, %s19, [#allocation3]
    $region5: #{tpu_custom_call.1} parent=1 // pred_fallthru
      _
    // Predicated region
    $region6: #{tpu_custom_call.1} parent=1 // pred_check
      _
    $region7: #{tpu_custom_call.1} parent=1 // pred_check_branch
      %23 = sbr.rel (0) target = $region9
    $region8: #{tpu_custom_call.1} parent=1 // pred_region
      %25 = vsyncadd [#allocation6], 0
      %s26 = sshll.u32 %s1, 4
      %s27 = int_to_ptr.hbm [resolvable:$true] %s26
      %s28 = sshll.u32 [#allocation5], 4
      %s29 = int_to_ptr.vmem [resolvable:$true] %s28
      %34 = dma.hbm_to_vmem [thread:$0]  %s27, 4096, %s29, [#allocation6], 64, 64, 4
    $region9: #{tpu_custom_call.1} parent=1 // pred_fallthru
      _
    // Predicated region
    $region10: #{tpu_custom_call.1} parent=1 // pred_check
      _
    $region11: #{tpu_custom_call.1} parent=1 // pred_check_branch
      %36 = sbr.rel (0) target = $region13
    $region12: #{tpu_custom_call.1} parent=1 // pred_region
      _
    $region13: #{tpu_custom_call.1} parent=1 // pred_fallthru
      _
    // Predicated region
    $region14: #{tpu_custom_call.1} parent=1 // pred_check
      _
    $region15: #{tpu_custom_call.1} parent=1 // pred_check_branch
      %38 = sbr.rel (0) target = $region17
    $region16: #{tpu_custom_call.1} parent=1 // pred_region
      %40 = dma.done [#allocation3], 128
    $region17: #{tpu_custom_call.1} parent=1 // pred_fallthru
      _
    // Predicated region
    $region18: #{tpu_custom_call.1} parent=1 // pred_check
      _
    $region19: #{tpu_custom_call.1} parent=1 // pred_check_branch
      %42 = sbr.rel (0) target = $region21
    $region20: #{tpu_custom_call.1} parent=1 // pred_region
      %44 = dma.done [#allocation6], 4096
    $region21: #{tpu_custom_call.1} parent=1 // pred_fallthru
      _
    %v45 = vld [vmem:[#allocation2] sm:$0xff]
    %v46 = vmax.f32 %v45, 0.0
    %48 = vst [vmem:[#allocation1] ss:$4 sm:$0xff] %v46
    %v49 = vld.sshfl [vmem:[#allocation1] sm:$0xff pattern:$0x73625140]
    %v50 = vld.sshfl [vmem:[#allocation1 + $0x8] sm:$0xff pattern:$0x73625140]
    %v51 = vld.sshfl [vmem:[#allocation1 + $0x10] sm:$0xff pattern:$0x73625140]
    %v52 = vld.sshfl [vmem:[#allocation1 + $0x18] sm:$0xff pattern:$0x73625140]
    %v57 = vpack.c.bf16 %v49, %v49
    %v58 = vpack.c.bf16 %v50, %v50
    %v59 = vpack.c.bf16 %v51, %v51
    %v60 = vpack.c.bf16 %v52, %v52
    %v61 = vld [vmem:[#allocation5] sm:$0xf]
    %v62 = vld [vmem:[#allocation5 + $0x4] sm:$0xf]
    %v63 = vld [vmem:[#allocation5 + $0x8] sm:$0xf]
    %v64 = vld [vmem:[#allocation5 + $0xc] sm:$0xf]
    %v65 = vld [vmem:[#allocation5 + $0x10] sm:$0xf]
    %v66 = vld [vmem:[#allocation5 + $0x14] sm:$0xf]
    %v67 = vld [vmem:[#allocation5 + $0x18] sm:$0xf]
    %v68 = vld [vmem:[#allocation5 + $0x1c] sm:$0xf]
    %v69 = vld [vmem:[#allocation5 + $0x20] sm:$0xf]
    %v70 = vld [vmem:[#allocation5 + $0x24] sm:$0xf]
    %v71 = vld [vmem:[#allocation5 + $0x28] sm:$0xf]
    %v72 = vld [vmem:[#allocation5 + $0x2c] sm:$0xf]
    %v73 = vld [vmem:[#allocation5 + $0x30] sm:$0xf]
    %v74 = vld [vmem:[#allocation5 + $0x34] sm:$0xf]
    %v75 = vld [vmem:[#allocation5 + $0x38] sm:$0xf]
    %v76 = vld [vmem:[#allocation5 + $0x3c] sm:$0xf]
    %v77 = vld [vmem:[#allocation5 + $0x40] sm:$0xf]
    %v78 = vld [vmem:[#allocation5 + $0x44] sm:$0xf]
    %v79 = vld [vmem:[#allocation5 + $0x48] sm:$0xf]
    %v80 = vld [vmem:[#allocation5 + $0x4c] sm:$0xf]
    %v81 = vld [vmem:[#allocation5 + $0x50] sm:$0xf]
    %v82 = vld [vmem:[#allocation5 + $0x54] sm:$0xf]
    %v83 = vld [vmem:[#allocation5 + $0x58] sm:$0xf]
    %v84 = vld [vmem:[#allocation5 + $0x5c] sm:$0xf]
    %v85 = vld [vmem:[#allocation5 + $0x60] sm:$0xf]
    %v86 = vld [vmem:[#allocation5 + $0x64] sm:$0xf]
    %v87 = vld [vmem:[#allocation5 + $0x68] sm:$0xf]
    %v88 = vld [vmem:[#allocation5 + $0x6c] sm:$0xf]
    %v89 = vld [vmem:[#allocation5 + $0x70] sm:$0xf]
    %v90 = vld [vmem:[#allocation5 + $0x74] sm:$0xf]
    %v91 = vld [vmem:[#allocation5 + $0x78] sm:$0xf]
    %v92 = vld [vmem:[#allocation5 + $0x7c] sm:$0xf]
    %v93 = vld [vmem:[#allocation5 + $0x80] sm:$0xf]
    %v94 = vld [vmem:[#allocation5 + $0x84] sm:$0xf]
    %v95 = vld [vmem:[#allocation5 + $0x88] sm:$0xf]
    %v96 = vld [vmem:[#allocation5 + $0x8c] sm:$0xf]
    %v97 = vld [vmem:[#allocation5 + $0x90] sm:$0xf]
    %v98 = vld [vmem:[#allocation5 + $0x94] sm:$0xf]
    %v99 = vld [vmem:[#allocation5 + $0x98] sm:$0xf]
    %v100 = vld [vmem:[#allocation5 + $0x9c] sm:$0xf]
    %v101 = vld [vmem:[#allocation5 + $0xa0] sm:$0xf]
    %v102 = vld [vmem:[#allocation5 + $0xa4] sm:$0xf]
    %v103 = vld [vmem:[#allocation5 + $0xa8] sm:$0xf]
    %v104 = vld [vmem:[#allocation5 + $0xac] sm:$0xf]
    %v105 = vld [vmem:[#allocation5 + $0xb0] sm:$0xf]
    %v106 = vld [vmem:[#allocation5 + $0xb4] sm:$0xf]
    %v107 = vld [vmem:[#allocation5 + $0xb8] sm:$0xf]
    %v108 = vld [vmem:[#allocation5 + $0xbc] sm:$0xf]
    %v109 = vld [vmem:[#allocation5 + $0xc0] sm:$0xf]
    %v110 = vld [vmem:[#allocation5 + $0xc4] sm:$0xf]
    %v111 = vld [vmem:[#allocation5 + $0xc8] sm:$0xf]
    %v112 = vld [vmem:[#allocation5 + $0xcc] sm:$0xf]
    %v113 = vld [vmem:[#allocation5 + $0xd0] sm:$0xf]
    %v114 = vld [vmem:[#allocation5 + $0xd4] sm:$0xf]
    %v115 = vld [vmem:[#allocation5 + $0xd8] sm:$0xf]
    %v116 = vld [vmem:[#allocation5 + $0xdc] sm:$0xf]
    %v117 = vld [vmem:[#allocation5 + $0xe0] sm:$0xf]
    %v118 = vld [vmem:[#allocation5 + $0xe4] sm:$0xf]
    %v119 = vld [vmem:[#allocation5 + $0xe8] sm:$0xf]
    %v120 = vld [vmem:[#allocation5 + $0xec] sm:$0xf]
    %v121 = vld [vmem:[#allocation5 + $0xf0] sm:$0xf]
    %v122 = vld [vmem:[#allocation5 + $0xf4] sm:$0xf]
    %v123 = vld [vmem:[#allocation5 + $0xf8] sm:$0xf]
    %v124 = vld [vmem:[#allocation5 + $0xfc] sm:$0xf]
    %v125 = vld [vmem:[%s2] sm:$0x1]
    %v127 = vperm.slane %v125, 0
    %v193 = vunpack.c.l.b16 %v61
    %v194 = vunpack.c.l.b16 %v62
    %v195 = vunpack.c.l.b16 %v63
    %v196 = vunpack.c.l.b16 %v64
    %v197 = vunpack.c.l.b16 %v65
    %v198 = vunpack.c.l.b16 %v66
    %v199 = vunpack.c.l.b16 %v67
    %v200 = vunpack.c.l.b16 %v68
    %v201 = vunpack.c.l.b16 %v69
    %v202 = vunpack.c.l.b16 %v70
    %v203 = vunpack.c.l.b16 %v71
    %v204 = vunpack.c.l.b16 %v72
    %v205 = vunpack.c.l.b16 %v73
    %v206 = vunpack.c.l.b16 %v74
    %v207 = vunpack.c.l.b16 %v75
    %v208 = vunpack.c.l.b16 %v76
    %v209 = vunpack.c.l.b16 %v77
    %v210 = vunpack.c.l.b16 %v78
    %v211 = vunpack.c.l.b16 %v79
    %v212 = vunpack.c.l.b16 %v80
    %v213 = vunpack.c.l.b16 %v81
    %v214 = vunpack.c.l.b16 %v82
    %v215 = vunpack.c.l.b16 %v83
    %v216 = vunpack.c.l.b16 %v84
    %v217 = vunpack.c.l.b16 %v85
    %v218 = vunpack.c.l.b16 %v86
    %v219 = vunpack.c.l.b16 %v87
    %v220 = vunpack.c.l.b16 %v88
    %v221 = vunpack.c.l.b16 %v89
    %v222 = vunpack.c.l.b16 %v90
    %v223 = vunpack.c.l.b16 %v91
    %v224 = vunpack.c.l.b16 %v92
    %v225 = vunpack.c.l.b16 %v93
    %v226 = vunpack.c.l.b16 %v94
    %v227 = vunpack.c.l.b16 %v95
    %v228 = vunpack.c.l.b16 %v96
    %v229 = vunpack.c.l.b16 %v97
    %v230 = vunpack.c.l.b16 %v98
    %v231 = vunpack.c.l.b16 %v99
    %v232 = vunpack.c.l.b16 %v100
    %v233 = vunpack.c.l.b16 %v101
    %v234 = vunpack.c.l.b16 %v102
    %v235 = vunpack.c.l.b16 %v103
    %v236 = vunpack.c.l.b16 %v104
    %v237 = vunpack.c.l.b16 %v105
    %v238 = vunpack.c.l.b16 %v106
    %v239 = vunpack.c.l.b16 %v107
    %v240 = vunpack.c.l.b16 %v108
    %v241 = vunpack.c.l.b16 %v109
    %v242 = vunpack.c.l.b16 %v110
    %v243 = vunpack.c.l.b16 %v111
    %v244 = vunpack.c.l.b16 %v112
    %v245 = vunpack.c.l.b16 %v113
    %v246 = vunpack.c.l.b16 %v114
    %v247 = vunpack.c.l.b16 %v115
    %v248 = vunpack.c.l.b16 %v116
    %v249 = vunpack.c.l.b16 %v117
    %v250 = vunpack.c.l.b16 %v118
    %v251 = vunpack.c.l.b16 %v119
    %v252 = vunpack.c.l.b16 %v120
    %v253 = vunpack.c.l.b16 %v121
    %v254 = vunpack.c.l.b16 %v122
    %v255 = vunpack.c.l.b16 %v123
    %v256 = vunpack.c.l.b16 %v124
    %v257 = vpack.c.b16 %v194, %v193
    %v258 = vpack.c.b16 %v196, %v195
    %v259 = vpack.c.b16 %v198, %v197
    %v260 = vpack.c.b16 %v200, %v199
    %v261 = vpack.c.b16 %v202, %v201
    %v262 = vpack.c.b16 %v204, %v203
    %v263 = vpack.c.b16 %v206, %v205
    %v264 = vpack.c.b16 %v208, %v207
    %v265 = vpack.c.b16 %v210, %v209
    %v266 = vpack.c.b16 %v212, %v211
    %v267 = vpack.c.b16 %v214, %v213
    %v268 = vpack.c.b16 %v216, %v215
    %v269 = vpack.c.b16 %v218, %v217
    %v270 = vpack.c.b16 %v220, %v219
    %v271 = vpack.c.b16 %v222, %v221
    %v272 = vpack.c.b16 %v224, %v223
    %v273 = vpack.c.b16 %v226, %v225
    %v274 = vpack.c.b16 %v228, %v227
    %v275 = vpack.c.b16 %v230, %v229
    %v276 = vpack.c.b16 %v232, %v231
    %v277 = vpack.c.b16 %v234, %v233
    %v278 = vpack.c.b16 %v236, %v235
    %v279 = vpack.c.b16 %v238, %v237
    %v280 = vpack.c.b16 %v240, %v239
    %v281 = vpack.c.b16 %v242, %v241
    %v282 = vpack.c.b16 %v244, %v243
    %v283 = vpack.c.b16 %v246, %v245
    %v284 = vpack.c.b16 %v248, %v247
    %v285 = vpack.c.b16 %v250, %v249
    %v286 = vpack.c.b16 %v252, %v251
    %v287 = vpack.c.b16 %v254, %v253
    %v288 = vpack.c.b16 %v256, %v255
    %321 = vmatpush.bf16.msra.mxu0 %v264
    %322 = vmatpush.bf16.msra.mxu0 %v263
    %323 = vmatpush.bf16.msra.mxu0 %v262
    %324 = vmatpush.bf16.msra.mxu0 %v261
    %325 = vmatpush.bf16.msra.mxu0 %v260
    %326 = vmatpush.bf16.msra.mxu0 %v259
    %327 = vmatpush.bf16.msra.mxu0 %v258
    %328 = vmatpush.bf16.msra.mxu0 %v257
    %329 = vmatmul.bf16.gmra.mxu0 %v57
    %v330 = vpop.f32.mrf.mxu0
    %v331 = vadd.f32 %v127, %v330
    %v332 = vpop.f32.mrf.mxu0
    %333 = vdwg.mxu0
    %334 = vmatpush.bf16.msra.mxu0 %v272
    %335 = vmatpush.bf16.msra.mxu0 %v271
    %336 = vmatpush.bf16.msra.mxu0 %v270
    %337 = vmatpush.bf16.msra.mxu0 %v269
    %338 = vmatpush.bf16.msra.mxu0 %v268
    %339 = vmatpush.bf16.msra.mxu0 %v267
    %340 = vmatpush.bf16.msra.mxu0 %v266
    %341 = vmatpush.bf16.msra.mxu0 %v265
    %342 = vmatmul.bf16.gmra.mxu0 %v58
    %v343 = vpop.f32.mrf.mxu0
    %v344 = vadd.f32 %v331, %v343
    %v345 = vpop.f32.mrf.mxu0
    %346 = vdwg.mxu0
    %347 = vmatpush.bf16.msra.mxu0 %v280
    %348 = vmatpush.bf16.msra.mxu0 %v279
    %349 = vmatpush.bf16.msra.mxu0 %v278
    %350 = vmatpush.bf16.msra.mxu0 %v277
    %351 = vmatpush.bf16.msra.mxu0 %v276
    %352 = vmatpush.bf16.msra.mxu0 %v275
    %353 = vmatpush.bf16.msra.mxu0 %v274
    %354 = vmatpush.bf16.msra.mxu0 %v273
    %355 = vmatmul.bf16.gmra.mxu0 %v59
    %v356 = vpop.f32.mrf.mxu0
    %v357 = vadd.f32 %v344, %v356
    %v358 = vpop.f32.mrf.mxu0
    %359 = vdwg.mxu0
    %360 = vmatpush.bf16.msra.mxu0 %v288
    %361 = vmatpush.bf16.msra.mxu0 %v287
    %362 = vmatpush.bf16.msra.mxu0 %v286
    %363 = vmatpush.bf16.msra.mxu0 %v285
    %364 = vmatpush.bf16.msra.mxu0 %v284
    %365 = vmatpush.bf16.msra.mxu0 %v283
    %366 = vmatpush.bf16.msra.mxu0 %v282
    %367 = vmatpush.bf16.msra.mxu0 %v281
    %368 = vmatmul.bf16.gmra.mxu0 %v60
    %v369 = vpop.f32.mrf.mxu0
    %v370 = vadd.f32 %v357, %v369
    %v371 = vpop.f32.mrf.mxu0
    %372 = vdwg.mxu0
    %373 = vst [vmem:[#allocation7] sm:$0x3] %v370
    // Predicated region
    $region22: #{tpu_custom_call.1} parent=1 // pred_check
      _
    $region23: #{tpu_custom_call.1} parent=1 // pred_check_branch
      %375 = sbr.rel (0) target = $region25
    $region24: #{tpu_custom_call.1} parent=1 // pred_region
      %377 = vsyncadd [#allocation4], 0
      %s379 = sshll.u32 [#allocation7], 4
      %s380 = int_to_ptr.vmem [resolvable:$true] %s379
      %s381 = sshll.u32 %s3, 4
      %s382 = int_to_ptr.hbm [resolvable:$true] %s381
      %384 = dma.vmem_to_hbm [thread:$0]  %s380, 32, %s382, [#allocation4]
    $region25: #{tpu_custom_call.1} parent=1 // pred_fallthru
      _
    // Predicated region
    $region26: #{tpu_custom_call.1} parent=1 // pred_check
      _
    $region27: #{tpu_custom_call.1} parent=1 // pred_check_branch
      %386 = sbr.rel (0) target = $region29
    $region28: #{tpu_custom_call.1} parent=1 // pred_region
      %388 = dma.done [#allocation4], 32
    $region29: #{tpu_custom_call.1} parent=1 // pred_fallthru
      _
    %389 = vsyncpa [#allocation3], 1
    %390 = vsyncpa [#allocation6], 1
    %391 = vsyncpa [#allocation4], 1

</llo_original>
